<compile_context>
chip_gen: v7x
topology: tpu7x:2x2x1
jax: 0.10.0
libtpu: 0.0.40
codegen_flags: <defaults>
</compile_context>

<pallas_src>
import jax
import jax.numpy as jnp
import numpy as np
from jax import lax
from jax.experimental import pallas as pl
from jax.experimental.pallas import tpu as pltpu

_EPS = 1e-12  # torch.nn.functional.normalize clamp_min eps


# ---------------------------------------------------------------------------
# Kernels
# ---------------------------------------------------------------------------

def _fused_kernel(q_ref, v_ref, ctx_ref, attn_ref):
    """Single-pass kernel: each block holds Bt whole batch elements.

    q_ref:    (Bt, D, 1)   pre-L2-normalized query, channels on sublanes
    v_ref:    (Bt, D, S)   raw value, channels on sublanes, spatial on lanes
    ctx_ref:  (Bt, D, S)
    attn_ref: (Bt, 1, S)   lane-dense attention map
    """
    qn = q_ref[...]
    v = v_ref[...]

    # Per-pixel channel L2 norm (F.normalize(value, dim=1)); only the (Bt,1,S)
    # reciprocal norm is kept -- the normalized value is never materialized.
    v_ss = jnp.sum(v * v, axis=1, keepdims=True)                 # (Bt, 1, S)
    inv_norm = lax.rsqrt(jnp.maximum(v_ss, _EPS * _EPS))         # (Bt, 1, S)

    # score[b, s] = <qn[b], v[b, :, s]> / max(||v[b, :, s]||, eps)
    score = jnp.sum(v * qn, axis=1, keepdims=True) * inv_norm    # (Bt, 1, S)

    # Per-batch min-max normalization (matches the torch numpy max/min + loop).
    s_max = jnp.max(score, axis=-1, keepdims=True)               # (Bt, 1, 1)
    s_min = jnp.min(score, axis=-1, keepdims=True)               # (Bt, 1, 1)
    # NOTE: like the torch original, this yields NaN when all scores in a
    # batch are identical (denominator == 0).
    inv_den = 1.0 / (s_max - s_min)                              # (Bt, 1, 1)
    attn = (score - s_min) * inv_den                             # (Bt, 1, S)

    attn_ref[...] = attn                                         # lane-dense vst
    # context = attn * normalized_value = (attn * inv_norm) * v
    ctx_ref[...] = (attn * inv_norm) * v


def _score_minmax_kernel(q_ref, v_ref, smin_ref, smax_ref):
    """Two-pass path, pass 1: per-batch score min/max reduced over S tiles."""
    si = pl.program_id(1)

    qn = q_ref[...]                                              # (1, D, 1)
    v = v_ref[...]                                               # (1, D, St)
    v_ss = jnp.sum(v * v, axis=1, keepdims=True)
    inv_norm = lax.rsqrt(jnp.maximum(v_ss, _EPS * _EPS))
    score = jnp.sum(v * qn, axis=1, keepdims=True) * inv_norm    # (1, 1, St)
    t_max = jnp.max(score, axis=-1, keepdims=True)               # (1, 1, 1)
    t_min = jnp.min(score, axis=-1, keepdims=True)

    @pl.when(si == 0)
    def _():
        smin_ref[...] = t_min
        smax_ref[...] = t_max

    @pl.when(si > 0)
    def _():
        smin_ref[...] = jnp.minimum(smin_ref[...], t_min)
        smax_ref[...] = jnp.maximum(smax_ref[...], t_max)


def _apply_attn_kernel(q_ref, smin_ref, smax_ref, v_ref, ctx_ref, attn_ref):
    """Two-pass path, pass 2: re-read value tiles, write ctx/attn."""
    qn = q_ref[...]                                              # (1, D, 1)
    v = v_ref[...]                                               # (1, D, St)
    v_ss = jnp.sum(v * v, axis=1, keepdims=True)
    inv_norm = lax.rsqrt(jnp.maximum(v_ss, _EPS * _EPS))
    score = jnp.sum(v * qn, axis=1, keepdims=True) * inv_norm    # (1, 1, St)

    inv_den = 1.0 / (smax_ref[...] - smin_ref[...])              # (1, 1, 1)
    attn = (score - smin_ref[...]) * inv_den                     # (1, 1, St)

    attn_ref[...] = attn
    ctx_ref[...] = (attn * inv_norm) * v


# ---------------------------------------------------------------------------
# Tiling / VMEM helpers
# ---------------------------------------------------------------------------

def _pick_batch_tile(B, D, S, *, max_block=4 << 20, min_block=512 << 10,
                     min_steps=4):
    """Pick a batch tile Bt (divisor of B).

    Targets value blocks <= ~4 MiB and >= min_steps pipelined grid steps when B
    allows, but never shrinks blocks below ~512 KiB just to add steps."""
    per_batch = D * S * 4
    divs = [d for d in range(B, 0, -1) if B % d == 0]
    bt = next((d for d in divs if d * per_batch <= max_block), 1)
    if B // bt >= min_steps:
        return bt
    for d in divs:  # descending -> first qualifying divisor is the largest
        if d < bt and B // d >= min_steps and d * per_batch >= min_block:
            return d
    return bt


def _pick_spatial_tile(S, D, *, target_block=2 << 20):
    """Largest multiple-of-128 divisor of S whose (1, D, St) block stays under
    ~target_block bytes; None if S cannot be tiled on 128-lane boundaries."""
    if S % 128 != 0:
        return None
    candidates = [k * 128 for k in range(1, S // 128 + 1) if S % (k * 128) == 0]
    fitting = [st for st in candidates if D * st * 4 <= target_block]
    return fitting[-1] if fitting else candidates[0]


def _vmem_budget(block_bytes, *, headroom=4 << 20):
    """Scoped-VMEM limit: double-buffered blocks + headroom, set explicitly
    (v5e scoped default is 16 MiB) and kept v7x-safe (<= 48 MiB of 64 MiB)."""
    total = 2 * sum(block_bytes) + headroom
    return int(min(max(total, 16 << 20), 48 << 20))


# ---------------------------------------------------------------------------
# pallas_call wrappers
# ---------------------------------------------------------------------------

def _fused_single_pass(qn3, v_flat):
    B, D, S = v_flat.shape
    Bt = _pick_batch_tile(B, D, S)
    grid = (B // Bt,)

    q_blk, v_blk, attn_blk = Bt * D * 4, Bt * D * S * 4, Bt * S * 4

    # TODO(synk): if xprof shows exposed DMA at step boundaries with >=3 grid
    # steps, add pipeline_mode=pl.Buffered(3) to the value/ctx BlockSpecs
    # (re-check the v7x VMEM budget before enabling).
    return pl.pallas_call(
        _fused_kernel,
        out_shape=(
            jax.ShapeDtypeStruct((B, D, S), jnp.float32),
            jax.ShapeDtypeStruct((B, 1, S), jnp.float32),
        ),
        grid_spec=pltpu.PrefetchScalarGridSpec(
            num_scalar_prefetch=0,
            grid=grid,
            in_specs=[
                pl.BlockSpec((Bt, D, 1), lambda b: (b, 0, 0)),
                pl.BlockSpec((Bt, D, S), lambda b: (b, 0, 0)),
            ],
            out_specs=[
                pl.BlockSpec((Bt, D, S), lambda b: (b, 0, 0)),
                pl.BlockSpec((Bt, 1, S), lambda b: (b, 0, 0)),
            ],
        ),
        compiler_params=pltpu.CompilerParams(
            dimension_semantics=("parallel",),
            vmem_limit_bytes=_vmem_budget([q_blk, v_blk, v_blk, attn_blk]),
        ),
    )(qn3, v_flat)


def _fused_two_pass(qn3, v_flat, St):
    B, D, S = v_flat.shape
    ns = S // St
    q_blk, v_blk, attn_blk = D * 4, D * St * 4, St * 4

    # Pass 1: per-batch score min/max (output block stays resident across S).
    smin, smax = pl.pallas_call(
        _score_minmax_kernel,
        out_shape=(
            jax.ShapeDtypeStruct((B, 1, 1), jnp.float32),
            jax.ShapeDtypeStruct((B, 1, 1), jnp.float32),
        ),
        grid_spec=pltpu.PrefetchScalarGridSpec(
            num_scalar_prefetch=0,
            grid=(B, ns),
            in_specs=[
                pl.BlockSpec((1, D, 1), lambda b, s: (b, 0, 0)),
                pl.BlockSpec((1, D, St), lambda b, s: (b, 0, s)),
            ],
            out_specs=[
                pl.BlockSpec((1, 1, 1), lambda b, s: (b, 0, 0)),
                pl.BlockSpec((1, 1, 1), lambda b, s: (b, 0, 0)),
            ],
        ),
        compiler_params=pltpu.CompilerParams(
            dimension_semantics=("parallel", "arbitrary"),
            vmem_limit_bytes=_vmem_budget([q_blk, v_blk]),
        ),
    )(qn3, v_flat)

    # Pass 2: re-read value tiles and write ctx/attn. Both grid axes are
    # independent -> both "parallel" (keeps both v7x TCs fed even at B == 1).
    ctx_flat, attn_flat = pl.pallas_call(
        _apply_attn_kernel,
        out_shape=(
            jax.ShapeDtypeStruct((B, D, S), jnp.float32),
            jax.ShapeDtypeStruct((B, 1, S), jnp.float32),
        ),
        grid_spec=pltpu.PrefetchScalarGridSpec(
            num_scalar_prefetch=0,
            grid=(B, ns),
            in_specs=[
                pl.BlockSpec((1, D, 1), lambda b, s: (b, 0, 0)),
                pl.BlockSpec((1, 1, 1), lambda b, s: (b, 0, 0)),
                pl.BlockSpec((1, 1, 1), lambda b, s: (b, 0, 0)),
                pl.BlockSpec((1, D, St), lambda b, s: (b, 0, s)),
            ],
            out_specs=[
                pl.BlockSpec((1, D, St), lambda b, s: (b, 0, s)),
                pl.BlockSpec((1, 1, St), lambda b, s: (b, 0, s)),
            ],
        ),
        compiler_params=pltpu.CompilerParams(
            dimension_semantics=("parallel", "parallel"),
            vmem_limit_bytes=_vmem_budget([q_blk, v_blk, v_blk, attn_blk]),
        ),
    )(qn3, smin, smax, v_flat)
    return ctx_flat, attn_flat


def cross_view_fusion(global_query, value, *,
                      two_pass_threshold_bytes=6 << 20,
                      spatial_tile_target_bytes=2 << 20):
    """global_query: (B, D) float32; value: (B, D, W, H) float32 (NCHW)."""
    B, D, W, H = value.shape
    S = W * H

    # F.normalize(global_query, p=2, dim=-1) once in the wrapper: tiny (B, D)
    # op in XLA, removes a per-grid-step reduce/rsqrt/broadcast in the kernel.
    qn = global_query / jnp.maximum(
        jnp.linalg.norm(global_query, axis=-1, keepdims=True), _EPS)

    # Free reshapes only -- no transposes, no extra HBM passes.
    qn3 = qn.reshape(B, D, 1)
    v_flat = value.reshape(B, D, S)

    per_batch_bytes = D * S * 4
    if per_batch_bytes > two_pass_threshold_bytes:
        St = _pick_spatial_tile(S, D, target_block=spatial_tile_target_bytes)
        if St is not None:
            ctx_flat, attn_flat = _fused_two_pass(qn3, v_flat, St)
            return (ctx_flat.reshape(B, D, W, H),
                    attn_flat.reshape(B, 1, W, H))
        # TODO(synk): S not tileable on 128-lane boundaries; fall back to one
        # whole batch element per block (may be VMEM-tight on v7x).

    ctx_flat, attn_flat = _fused_single_pass(qn3, v_flat)
    return ctx_flat.reshape(B, D, W, H), attn_flat.reshape(B, 1, W, H)


# ---------------------------------------------------------------------------
# Reference + test
# ---------------------------------------------------------------------------

def _reference(global_query, value):
    """Pure-JAX reference of the torch forward."""
    B, D, W, H = value.shape
    q = global_query / jnp.maximum(
        jnp.linalg.norm(global_query, axis=-1, keepdims=True), _EPS)
    vn = value / jnp.maximum(
        jnp.linalg.norm(value, axis=1, keepdims=True), _EPS)
    new_value = jnp.transpose(vn, (0, 2, 3, 1)).reshape(B, W * H, D)
    score = jnp.einsum("bd,bsd->bs", q, new_value)
    s_max = jnp.max(score, axis=1, keepdims=True)
    s_min = jnp.min(score, axis=1, keepdims=True)
    attn = (score - s_min) / (s_max - s_min)
    attn = attn.reshape(B, 1, W, H)
    context = attn * vn
    return context, attn


if __name__ == "__main__":
    # The module has no parameters (__init__ is empty); only inputs are needed.
    B, D, W, H = 2, 32, 16, 16
    key = jax.random.PRNGKey(0)
    k_q, k_v = jax.random.split(key)
    global_query = jax.random.normal(k_q, (B, D), dtype=jnp.float32)
    value = jax.random.normal(k_v, (B, D, W, H), dtype=jnp.float32)

    ctx_ref, attn_ref = _reference(global_query, value)

    # Primary single-pass (batch-tiled) path.
    context, attn = cross_view_fusion(global_query, value)
    jax.block_until_ready((context, attn))
    np.testing.assert_allclose(np.asarray(context), np.asarray(ctx_ref),
                               rtol=1e-5, atol=1e-5)
    np.testing.assert_allclose(np.asarray(attn), np.asarray(attn_ref),
                               rtol=1e-5, atol=1e-5)

    # Two-pass spatial-tiling path (large per-batch D*S / v7x fallback),
    # forced here with a tiny threshold and St=128 so the min/max accumulation
    # across S tiles is exercised.
    context2, attn2 = cross_view_fusion(global_query, value,
                                        two_pass_threshold_bytes=0,
                                        spatial_tile_target_bytes=16 << 10)
    jax.block_until_ready((context2, attn2))
    np.testing.assert_allclose(np.asarray(context2), np.asarray(ctx_ref),
                               rtol=1e-5, atol=1e-5)
    np.testing.assert_allclose(np.asarray(attn2), np.asarray(attn_ref),
                               rtol=1e-5, atol=1e-5)

    print("KERNEL_OK")
</pallas_src>

<mosaic_0001>
module attributes {stable_mosaic.version = 11 : i64} {
  func.func @_fused_kernel(%arg0: i32, %arg1: memref<2x32x1xf32, #tpu.memory_space<vmem>>, %arg2: memref<2x32x256xf32, #tpu.memory_space<vmem>>, %arg3: memref<2x32x256xf32, #tpu.memory_space<vmem>>, %arg4: memref<2x1x256xf32, #tpu.memory_space<vmem>>) attributes {dimension_semantics = [#tpu.dimension_semantics<parallel>], iteration_bounds = array<i64: 1>, scalar_prefetch = 0 : i64, scratch_operands = 0 : i64, tpu.core_type = #tpu.core_type<tc>, window_params = [{transform_indices = @transform_0, window_bounds = array<i64: 2, 32, 1>}, {transform_indices = @transform_1, window_bounds = array<i64: 2, 32, 256>}, {transform_indices = @transform_2, window_bounds = array<i64: 2, 32, 256>}, {transform_indices = @transform_3, window_bounds = array<i64: 2, 1, 256>}]} {
    %c0 = arith.constant 0 : index
    %c0_0 = arith.constant 0 : index
    %c0_1 = arith.constant 0 : index
    %0 = vector.load %arg1[%c0, %c0_0, %c0_1] : memref<2x32x1xf32, #tpu.memory_space<vmem>>, vector<2x32x1xf32>
    %c0_2 = arith.constant 0 : index
    %c0_3 = arith.constant 0 : index
    %c0_4 = arith.constant 0 : index
    %1 = vector.load %arg2[%c0_2, %c0_3, %c0_4] : memref<2x32x256xf32, #tpu.memory_space<vmem>>, vector<2x32x256xf32>
    %2 = arith.mulf %1, %1 : vector<2x32x256xf32>
    %cst = arith.constant dense<0.000000e+00> : vector<2x256xf32>
    %3 = vector.multi_reduction <add>, %2, %cst [1] : vector<2x32x256xf32> to vector<2x256xf32>
    %4 = vector.shape_cast %3 : vector<2x256xf32> to vector<2x1x256xf32>
    %cst_5 = arith.constant 1.000000e-24 : f32
    %5 = vector.broadcast %cst_5 : f32 to vector<2x1x256xf32>
    %6 = arith.maximumf %4, %5 : vector<2x1x256xf32>
    %7 = math.rsqrt %6 : vector<2x1x256xf32>
    %8 = vector.broadcast %0 : vector<2x32x1xf32> to vector<2x32x256xf32>
    %9 = arith.mulf %1, %8 : vector<2x32x256xf32>
    %cst_6 = arith.constant dense<0.000000e+00> : vector<2x256xf32>
    %10 = vector.multi_reduction <add>, %9, %cst_6 [1] : vector<2x32x256xf32> to vector<2x256xf32>
    %11 = vector.shape_cast %10 : vector<2x256xf32> to vector<2x1x256xf32>
    %12 = arith.mulf %11, %7 : vector<2x1x256xf32>
    %cst_7 = arith.constant dense<0xFF800000> : vector<2x1xf32>
    %13 = vector.multi_reduction <maximumf>, %12, %cst_7 [2] : vector<2x1x256xf32> to vector<2x1xf32>
    %14 = vector.shape_cast %13 : vector<2x1xf32> to vector<2x1x1xf32>
    %cst_8 = arith.constant dense<0x7F800000> : vector<2x1xf32>
    %15 = vector.multi_reduction <minimumf>, %12, %cst_8 [2] : vector<2x1x256xf32> to vector<2x1xf32>
    %16 = vector.shape_cast %15 : vector<2x1xf32> to vector<2x1x1xf32>
    %17 = arith.subf %14, %16 : vector<2x1x1xf32>
    %cst_9 = arith.constant 1.000000e+00 : f32
    %18 = vector.broadcast %cst_9 : f32 to vector<2x1x1xf32>
    %19 = arith.divf %18, %17 : vector<2x1x1xf32>
    %20 = vector.broadcast %16 : vector<2x1x1xf32> to vector<2x1x256xf32>
    %21 = arith.subf %12, %20 : vector<2x1x256xf32>
    %22 = vector.broadcast %19 : vector<2x1x1xf32> to vector<2x1x256xf32>
    %23 = arith.mulf %21, %22 : vector<2x1x256xf32>
    %c0_10 = arith.constant 0 : index
    %c0_11 = arith.constant 0 : index
    %c0_12 = arith.constant 0 : index
    %24 = vector.load %arg4[%c0_10, %c0_11, %c0_12] : memref<2x1x256xf32, #tpu.memory_space<vmem>>, vector<2x1x256xf32>
    tpu.vector_store %arg4[%c0_10, %c0_11, %c0_12], %23 {strides = array<i32>} : memref<2x1x256xf32, #tpu.memory_space<vmem>>, vector<2x1x256xf32>,
    %25 = arith.mulf %23, %7 : vector<2x1x256xf32>
    %26 = vector.broadcast %25 : vector<2x1x256xf32> to vector<2x32x256xf32>
    %27 = arith.mulf %26, %1 : vector<2x32x256xf32>
    %c0_13 = arith.constant 0 : index
    %c0_14 = arith.constant 0 : index
    %c0_15 = arith.constant 0 : index
    %28 = vector.load %arg3[%c0_13, %c0_14, %c0_15] : memref<2x32x256xf32, #tpu.memory_space<vmem>>, vector<2x32x256xf32>
    tpu.vector_store %arg3[%c0_13, %c0_14, %c0_15], %27 {strides = array<i32>} : memref<2x32x256xf32, #tpu.memory_space<vmem>>, vector<2x32x256xf32>,
    return
  }
  func.func @transform_0(%arg0: i32) -> (i32, i32, i32) {
    %c0_i32 = arith.constant 0 : i32
    %c0_i32_0 = arith.constant 0 : i32
    %c0_i32_1 = arith.constant 0 : i32
    return %arg0, %c0_i32, %c0_i32_0 : i32, i32, i32
  }
  func.func @transform_1(%arg0: i32) -> (i32, i32, i32) {
    %c0_i32 = arith.constant 0 : i32
    %c0_i32_0 = arith.constant 0 : i32
    %c0_i32_1 = arith.constant 0 : i32
    return %arg0, %c0_i32, %c0_i32_0 : i32, i32, i32
  }
  func.func @transform_2(%arg0: i32) -> (i32, i32, i32) {
    %c0_i32 = arith.constant 0 : i32
    %c0_i32_0 = arith.constant 0 : i32
    %c0_i32_1 = arith.constant 0 : i32
    return %arg0, %c0_i32, %c0_i32_0 : i32, i32, i32
  }
  func.func @transform_3(%arg0: i32) -> (i32, i32, i32) {
    %c0_i32 = arith.constant 0 : i32
    %c0_i32_0 = arith.constant 0 : i32
    %c0_i32_1 = arith.constant 0 : i32
    return %arg0, %c0_i32, %c0_i32_0 : i32, i32, i32
  }
}

</mosaic_0001>

<llo_original>
// kernel: tpu_custom_call.1
$region0: #{tpu_custom_call.1}
  #allocation0 [shape = 'u32[]', space=smem, size = 0x4, offset = 0x4, fixed_abs, tag = 'smem constant byte address 0x4 - core index']
  #allocation1 [shape = 'u32[144,128]{1,0:T(1,128)}', space=vmem, size = 0x12000, scoped, tag = 'internal scratch']
  %s0 = inlined_call_operand.vmem [shape: f32[2,32,1], index: 0, kind: input, shape index: {}]
  %s1 = inlined_call_operand.hbm [shape: f32[2,32,256], index: 1, kind: input, shape index: {}]
  %s2 = inlined_call_operand.hbm [shape: f32[2,32,256], index: 2, kind: output, shape index: {0}]
  %s3 = inlined_call_operand.hbm [shape: f32[2,1,256], index: 3, kind: output, shape index: {1}]
  %4 = xla_tuple %s2, %s3
  %s5 = sld [smem:[#allocation0]]
  $region30: #{tpu_custom_call.1} parent=0
    _
  %s7 = ssub.s32 1, %s5
  %s8 = scalar_select 0, %s7, %s5
  $region1: #{tpu_custom_call.1} parent=0
    #allocation2 [shape = 'u8[65536]{0}', space=vmem, size = 0x10000, scoped, tag = 'input window, operand 1, single buffered']
    #allocation3 [shape = 's32[1]{0}', space=sflag, size = 0x4, scoped, tag = 'scoped memory for tpu_custom_call.1']
    #allocation4 [shape = 's32[1]{0}', space=sflag, size = 0x4, scoped, tag = 'scoped memory for tpu_custom_call.1']
    #allocation5 [shape = 'u8[65536]{0}', space=vmem, size = 0x10000, scoped, tag = 'output window, operand 0, single buffered']
    #allocation6 [shape = 'u8[2048]{0}', space=vmem, size = 0x800, scoped, tag = 'output window, operand 1, single buffered']
    #allocation7 [shape = 's32[1]{0}', space=sflag, size = 0x4, scoped, tag = 'scoped memory for tpu_custom_call.1']
    %9 = vsyncpa [#allocation3], 0
    %10 = vsyncpa [#allocation4], 0
    %11 = vsyncpa [#allocation7], 0
    // Predicated region
    $region2: #{tpu_custom_call.1} parent=1 // pred_check
      _
    $region3: #{tpu_custom_call.1} parent=1 // pred_check_branch
      %13 = sbr.rel (0) target = $region5
    $region4: #{tpu_custom_call.1} parent=1 // pred_region
      _
    $region5: #{tpu_custom_call.1} parent=1 // pred_fallthru
      _
    // Predicated region
    $region6: #{tpu_custom_call.1} parent=1 // pred_check
      _
    $region7: #{tpu_custom_call.1} parent=1 // pred_check_branch
      %15 = sbr.rel (0) target = $region9
    $region8: #{tpu_custom_call.1} parent=1 // pred_region
      %s17 = ssub.s32 2048, 2048
      %18 = vsyncadd [#allocation3], %s17
      %s19 = sshll.u32 [#allocation2], 4
      %s20 = int_to_ptr.vmem [resolvable:$true] %s19
      %25 = dma.hbm_to_vmem [thread:$0]  %s1, 2048, %s20, [#allocation3], 256, 256, 16
    $region9: #{tpu_custom_call.1} parent=1 // pred_fallthru
      _
    // Predicated region
    $region10: #{tpu_custom_call.1} parent=1 // pred_check
      _
    $region11: #{tpu_custom_call.1} parent=1 // pred_check_branch
      %27 = sbr.rel (0) target = $region13
    $region12: #{tpu_custom_call.1} parent=1 // pred_region
      %28 = dma.done [#allocation3], 2048
    $region13: #{tpu_custom_call.1} parent=1 // pred_fallthru
      _
    %v29 = vld [vmem:[%s0] sm:$0xff]
    %v30 = vld [vmem:[%s0 + $0x8] sm:$0xff]
    %v31 = vld [vmem:[%s0 + $0x10] sm:$0xff]
    %v32 = vld [vmem:[%s0 + $0x18] sm:$0xff]
    %v33 = vld [vmem:[%s0 + $0x20] sm:$0xff]
    %v34 = vld [vmem:[%s0 + $0x28] sm:$0xff]
    %v35 = vld [vmem:[%s0 + $0x30] sm:$0xff]
    %v36 = vld [vmem:[%s0 + $0x38] sm:$0xff]
    %v37 = vld [vmem:[#allocation2] sm:$0xff]
    %v38 = vld [vmem:[#allocation2 + $0x8] sm:$0xff]
    %v39 = vld [vmem:[#allocation2 + $0x10] sm:$0xff]
    %v40 = vld [vmem:[#allocation2 + $0x18] sm:$0xff]
    %v41 = vld [vmem:[#allocation2 + $0x20] sm:$0xff]
    %v42 = vld [vmem:[#allocation2 + $0x28] sm:$0xff]
    %v43 = vld [vmem:[#allocation2 + $0x30] sm:$0xff]
    %v44 = vld [vmem:[#allocation2 + $0x38] sm:$0xff]
    %v45 = vld [vmem:[#allocation2 + $0x40] sm:$0xff]
    %v46 = vld [vmem:[#allocation2 + $0x48] sm:$0xff]
    %v47 = vld [vmem:[#allocation2 + $0x50] sm:$0xff]
    %v48 = vld [vmem:[#allocation2 + $0x58] sm:$0xff]
    %v49 = vld [vmem:[#allocation2 + $0x60] sm:$0xff]
    %v50 = vld [vmem:[#allocation2 + $0x68] sm:$0xff]
    %v51 = vld [vmem:[#allocation2 + $0x70] sm:$0xff]
    %v52 = vld [vmem:[#allocation2 + $0x78] sm:$0xff]
    %v53 = vmul.f32 %v37, %v37
    %v54 = vmul.f32 %v38, %v38
    %v55 = vmul.f32 %v39, %v39
    %v56 = vmul.f32 %v40, %v40
    %v57 = vmul.f32 %v41, %v41
    %v58 = vmul.f32 %v42, %v42
    %v59 = vmul.f32 %v43, %v43
    %v60 = vmul.f32 %v44, %v44
    %v61 = vmul.f32 %v45, %v45
    %v62 = vmul.f32 %v46, %v46
    %v63 = vmul.f32 %v47, %v47
    %v64 = vmul.f32 %v48, %v48
    %v65 = vmul.f32 %v49, %v49
    %v66 = vmul.f32 %v50, %v50
    %v67 = vmul.f32 %v51, %v51
    %v68 = vmul.f32 %v52, %v52
    %v69 = vadd.f32 %v53, %v55
    %v70 = vadd.f32 %v69, %v57
    %v71 = vadd.f32 %v70, %v59
    %v72 = vrot.slane %v71, 4
    %v73 = vadd.f32 %v71, %v72
    %v74 = vrot.slane %v73, 2
    %v75 = vadd.f32 %v73, %v74
    %v76 = vrot.slane %v75, 1
    %v77 = vadd.f32 %v75, %v76
    %v78 = vadd.f32 %v54, %v56
    %v79 = vadd.f32 %v78, %v58
    %v80 = vadd.f32 %v79, %v60
    %v81 = vrot.slane %v80, 4
    %v82 = vadd.f32 %v80, %v81
    %v83 = vrot.slane %v82, 2
    %v84 = vadd.f32 %v82, %v83
    %v85 = vrot.slane %v84, 1
    %v86 = vadd.f32 %v84, %v85
    %v87 = vadd.f32 %v61, %v63
    %v88 = vadd.f32 %v87, %v65
    %v89 = vadd.f32 %v88, %v67
    %v90 = vrot.slane %v89, 4
    %v91 = vadd.f32 %v89, %v90
    %v92 = vrot.slane %v91, 2
    %v93 = vadd.f32 %v91, %v92
    %v94 = vrot.slane %v93, 1
    %v95 = vadd.f32 %v93, %v94
    %v96 = vadd.f32 %v62, %v64
    %v97 = vadd.f32 %v96, %v66
    %v98 = vadd.f32 %v97, %v68
    %v99 = vrot.slane %v98, 4
    %v100 = vadd.f32 %v98, %v99
    %v101 = vrot.slane %v100, 2
    %v102 = vadd.f32 %v100, %v101
    %v103 = vrot.slane %v102, 1
    %v104 = vadd.f32 %v102, %v103
    %v105 = vmax.f32 %v77, 1e-24
    %v106 = vmax.f32 %v86, 1e-24
    %v107 = vmax.f32 %v95, 1e-24
    %v108 = vmax.f32 %v104, 1e-24
    %v109 = vrsqrt.pop %v105
    %v110 = vrsqrt.pop %v106
    %v111 = vrsqrt.pop %v107
    %v112 = vrsqrt.pop %v108
    %114 = vset.pattern.permute.xlu0 0
    %115 = vperm.xlu0 %114, %v29
    %v116 = vpop.permute.xlu0 %115
    %119 = vset.pattern.permute.xlu0 0
    %120 = vperm.xlu0 %119, %v30
    %v121 = vpop.permute.xlu0 %120
    %124 = vset.pattern.permute.xlu0 0
    %125 = vperm.xlu0 %124, %v31
    %v126 = vpop.permute.xlu0 %125
    %129 = vset.pattern.permute.xlu0 0
    %130 = vperm.xlu0 %129, %v32
    %v131 = vpop.permute.xlu0 %130
    %134 = vset.pattern.permute.xlu0 0
    %135 = vperm.xlu0 %134, %v33
    %v136 = vpop.permute.xlu0 %135
    %139 = vset.pattern.permute.xlu0 0
    %140 = vperm.xlu0 %139, %v34
    %v141 = vpop.permute.xlu0 %140
    %144 = vset.pattern.permute.xlu0 0
    %145 = vperm.xlu0 %144, %v35
    %v146 = vpop.permute.xlu0 %145
    %149 = vset.pattern.permute.xlu0 0
    %150 = vperm.xlu0 %149, %v36
    %v151 = vpop.permute.xlu0 %150
    %v153 = vmul.f32 %v37, %v116
    %v154 = vmul.f32 %v38, %v116
    %v155 = vmul.f32 %v39, %v121
    %v156 = vmul.f32 %v40, %v121
    %v157 = vmul.f32 %v41, %v126
    %v158 = vmul.f32 %v42, %v126
    %v159 = vmul.f32 %v43, %v131
    %v160 = vmul.f32 %v44, %v131
    %v161 = vmul.f32 %v45, %v136
    %v162 = vmul.f32 %v46, %v136
    %v163 = vmul.f32 %v47, %v141
    %v164 = vmul.f32 %v48, %v141
    %v165 = vmul.f32 %v49, %v146
    %v166 = vmul.f32 %v50, %v146
    %v167 = vmul.f32 %v51, %v151
    %v168 = vmul.f32 %v52, %v151
    %v169 = vadd.f32 %v153, %v155
    %v170 = vadd.f32 %v169, %v157
    %v171 = vadd.f32 %v170, %v159
    %v172 = vrot.slane %v171, 4
    %v173 = vadd.f32 %v171, %v172
    %v174 = vrot.slane %v173, 2
    %v175 = vadd.f32 %v173, %v174
    %v176 = vrot.slane %v175, 1
    %v177 = vadd.f32 %v175, %v176
    %v178 = vadd.f32 %v154, %v156
    %v179 = vadd.f32 %v178, %v158
    %v180 = vadd.f32 %v179, %v160
    %v181 = vrot.slane %v180, 4
    %v182 = vadd.f32 %v180, %v181
    %v183 = vrot.slane %v182, 2
    %v184 = vadd.f32 %v182, %v183
    %v185 = vrot.slane %v184, 1
    %v186 = vadd.f32 %v184, %v185
    %v187 = vadd.f32 %v161, %v163
    %v188 = vadd.f32 %v187, %v165
    %v189 = vadd.f32 %v188, %v167
    %v190 = vrot.slane %v189, 4
    %v191 = vadd.f32 %v189, %v190
    %v192 = vrot.slane %v191, 2
    %v193 = vadd.f32 %v191, %v192
    %v194 = vrot.slane %v193, 1
    %v195 = vadd.f32 %v193, %v194
    %v196 = vadd.f32 %v162, %v164
    %v197 = vadd.f32 %v196, %v166
    %v198 = vadd.f32 %v197, %v168
    %v199 = vrot.slane %v198, 4
    %v200 = vadd.f32 %v198, %v199
    %v201 = vrot.slane %v200, 2
    %v202 = vadd.f32 %v200, %v201
    %v203 = vrot.slane %v202, 1
    %v204 = vadd.f32 %v202, %v203
    %v205 = vmul.f32 %v177, %v109
    %v206 = vmul.f32 %v186, %v110
    %v207 = vmul.f32 %v195, %v111
    %v208 = vmul.f32 %v204, %v112
    %v209 = vmax.f32 %v205, %v206
    %210 = vmax.xlane.f32.xlu0 %v209
    %v211 = vpop.xlane.xlu0 %210
    %v212 = vmax.f32 %v207, %v208
    %213 = vmax.xlane.f32.xlu0 %v212
    %v214 = vpop.xlane.xlu0 %213
    %v215 = vmin.f32 %v205, %v206
    %216 = vmin.xlane.f32.xlu0 %v215
    %v217 = vpop.xlane.xlu0 %216
    %v218 = vmin.f32 %v207, %v208
    %219 = vmin.xlane.f32.xlu0 %v218
    %v220 = vpop.xlane.xlu0 %219
    %v221 = vsub.f32 %v211, %v217
    %v222 = vsub.f32 %v214, %v220
    %v223 = vrcp.pop %v221
    %v224 = vmul.f32 1.0, %v223
    %v225 = vrcp.pop %v222
    %v226 = vmul.f32 1.0, %v225
    %v227 = vsub.f32 %v205, %v217
    %v228 = vsub.f32 %v206, %v217
    %v229 = vsub.f32 %v207, %v220
    %v230 = vsub.f32 %v208, %v220
    %v231 = vmul.f32 %v227, %v224
    %v232 = vmul.f32 %v228, %v224
    %v233 = vmul.f32 %v229, %v226
    %v234 = vmul.f32 %v230, %v226
    %v239 = vcombine.low %v231, %v232
    %v241 = vunpack.c.l.s4 1966171168
    %v242 = vunpack.c.0.s8 %v241
    %v243 = vlaneseq
    %v244 = vshrl.u32 %v243, 7
    %v245 = vsub.s32 %v242, %v244
    %v246 = vrot.slane %v239, %v245
    %v248 = vunpack.c.l.s4 1966171168
    %v249 = vunpack.c.0.s8 %v248
    %v250 = vlaneseq
    %v251 = vshrl.u32 %v250, 7
    %v252 = vsub.s32 %v249, %v251
    %v253 = vrot.slane %v246, %v252
    %v254 = vcombine.low %v233, %v234
    %v256 = vunpack.c.l.s4 1966171168
    %v257 = vunpack.c.0.s8 %v256
    %v258 = vlaneseq
    %v259 = vshrl.u32 %v258, 7
    %v260 = vsub.s32 %v257, %v259
    %v261 = vrot.slane %v254, %v260
    %v263 = vunpack.c.l.s4 1966171168
    %v264 = vunpack.c.0.s8 %v263
    %v265 = vlaneseq
    %v266 = vshrl.u32 %v265, 7
    %v267 = vsub.s32 %v264, %v266
    %v268 = vrot.slane %v261, %v267
    %v271 = vlaneseq
    %vm272 = vcmp.ge.s32.totalorder %v271, 0
    %vm273 = vcmp.lt.s32.totalorder %v271, 256
    %vm274 = vmand %vm272, %vm273
    %275 = vst.msk [vmem:[#allocation6] sm:$0x3] %vm274, %v253
    %276 = vst.msk [vmem:[#allocation6 + $0x2] sm:$0x3] %vm274, %v268
    %v277 = vmul.f32 %v231, %v109
    %v278 = vmul.f32 %v232, %v110
    %v279 = vmul.f32 %v233, %v111
    %v280 = vmul.f32 %v234, %v112
    %v281 = vmul.f32 %v277, %v37
    %v282 = vmul.f32 %v278, %v38
    %v283 = vmul.f32 %v277, %v39
    %v284 = vmul.f32 %v278, %v40
    %v285 = vmul.f32 %v277, %v41
    %v286 = vmul.f32 %v278, %v42
    %v287 = vmul.f32 %v277, %v43
    %v288 = vmul.f32 %v278, %v44
    %v289 = vmul.f32 %v279, %v45
    %v290 = vmul.f32 %v280, %v46
    %v291 = vmul.f32 %v279, %v47
    %v292 = vmul.f32 %v280, %v48
    %v293 = vmul.f32 %v279, %v49
    %v294 = vmul.f32 %v280, %v50
    %v295 = vmul.f32 %v279, %v51
    %v296 = vmul.f32 %v280, %v52
    %297 = vst [vmem:[#allocation5] sm:$0xff] %v281
    %298 = vst [vmem:[#allocation5 + $0x8] sm:$0xff] %v282
    %299 = vst [vmem:[#allocation5 + $0x10] sm:$0xff] %v283
    %300 = vst [vmem:[#allocation5 + $0x18] sm:$0xff] %v284
    %301 = vst [vmem:[#allocation5 + $0x20] sm:$0xff] %v285
    %302 = vst [vmem:[#allocation5 + $0x28] sm:$0xff] %v286
    %303 = vst [vmem:[#allocation5 + $0x30] sm:$0xff] %v287
    %304 = vst [vmem:[#allocation5 + $0x38] sm:$0xff] %v288
    %305 = vst [vmem:[#allocation5 + $0x40] sm:$0xff] %v289
    %306 = vst [vmem:[#allocation5 + $0x48] sm:$0xff] %v290
    %307 = vst [vmem:[#allocation5 + $0x50] sm:$0xff] %v291
    %308 = vst [vmem:[#allocation5 + $0x58] sm:$0xff] %v292
    %309 = vst [vmem:[#allocation5 + $0x60] sm:$0xff] %v293
    %310 = vst [vmem:[#allocation5 + $0x68] sm:$0xff] %v294
    %311 = vst [vmem:[#allocation5 + $0x70] sm:$0xff] %v295
    %312 = vst [vmem:[#allocation5 + $0x78] sm:$0xff] %v296
    // Predicated region
    $region14: #{tpu_custom_call.1} parent=1 // pred_check
      _
    $region15: #{tpu_custom_call.1} parent=1 // pred_check_branch
      %314 = sbr.rel (0) target = $region17
    $region16: #{tpu_custom_call.1} parent=1 // pred_region
      %s316 = ssub.s32 2048, 2048
      %317 = vsyncadd [#allocation4], %s316
      %s318 = sshll.u32 [#allocation5], 4
      %s319 = int_to_ptr.vmem [resolvable:$true] %s318
      %324 = dma.vmem_to_hbm [thread:$0]  %s319, 2048, %s2, [#allocation4], 256, 256, 16
    $region17: #{tpu_custom_call.1} parent=1 // pred_fallthru
      _
    // Predicated region
    $region18: #{tpu_custom_call.1} parent=1 // pred_check
      _
    $region19: #{tpu_custom_call.1} parent=1 // pred_check_branch
      %326 = sbr.rel (0) target = $region21
    $region20: #{tpu_custom_call.1} parent=1 // pred_region
      %s328 = ssub.s32 64, 64
      %329 = vsyncadd [#allocation7], %s328
      %s330 = sshll.u32 [#allocation6], 4
      %s331 = int_to_ptr.vmem [resolvable:$true] %s330
      %336 = dma.vmem_to_hbm [thread:$0]  %s331, 64, %s3, [#allocation7], 32, 32, 2
    $region21: #{tpu_custom_call.1} parent=1 // pred_fallthru
      _
    // Predicated region
    $region22: #{tpu_custom_call.1} parent=1 // pred_check
      _
    $region23: #{tpu_custom_call.1} parent=1 // pred_check_branch
      %338 = sbr.rel (0) target = $region25
    $region24: #{tpu_custom_call.1} parent=1 // pred_region
      %339 = dma.done [#allocation4], 2048
    $region25: #{tpu_custom_call.1} parent=1 // pred_fallthru
      _
    // Predicated region
    $region26: #{tpu_custom_call.1} parent=1 // pred_check
      _
    $region27: #{tpu_custom_call.1} parent=1 // pred_check_branch
      %341 = sbr.rel (0) target = $region29
    $region28: #{tpu_custom_call.1} parent=1 // pred_region
      %342 = dma.done [#allocation7], 64
    $region29: #{tpu_custom_call.1} parent=1 // pred_fallthru
      _
    %343 = vsyncpa [#allocation3], 1
    %344 = vsyncpa [#allocation4], 1
    %345 = vsyncpa [#allocation7], 1

</llo_original>
